<compile_context>
chip_gen: v7x
topology: tpu7x:2x2x1
jax: 0.10.0
libtpu: 0.0.40
codegen_flags: <defaults>
</compile_context>

<pallas_src>
import functools

import jax
import jax.numpy as jnp
from jax.experimental import pallas as pl
from jax.experimental.pallas import tpu as pltpu


def _round_up(x, m):
    return ((x + m - 1) // m) * m


def _mlp_kernel(x_ref, w1_ref, b1_ref, w2_ref, b2_ref, o_ref):
    # x:  [TB, D_in] (f32, cast to bf16 in VMEM)   w1: [D_in, H]   (bf16)
    # b1: [1, H] (f32)                             w2: [H, D_out]  (bf16)
    # b2: [1, D_out] (f32)                         o:  [TB, D_out] (f32)
    x_bf = x_ref[...].astype(w1_ref.dtype)
    h = jnp.dot(x_bf, w1_ref[...], preferred_element_type=jnp.float32)
    h = jnp.maximum(h + b1_ref[...], 0.0)                       # f32 bias + ReLU
    out = jnp.dot(h.astype(w2_ref.dtype), w2_ref[...],
                  preferred_element_type=jnp.float32)
    o_ref[...] = (out + b2_ref[...]).astype(o_ref.dtype)


def prepare_params(w1, b1, w2, b2):
    """One-time parameter packing: bf16 weights (MXU path), f32 2-D biases.

    Do this once at parameter creation/load time so projection_head does not
    re-read f32 weights from HBM and write bf16 copies on every call.
    """
    return (w1.astype(jnp.bfloat16),
            b1.reshape(1, -1).astype(jnp.float32),
            w2.astype(jnp.bfloat16),
            b2.reshape(1, -1).astype(jnp.float32))


@functools.partial(jax.jit, static_argnames=("block_b",))
def projection_head(x, w1, b1, w2, b2, *, block_b=512):
    """x: [B, D_in] -> [B, D_out]; same math as nn.Linear -> ReLU -> nn.Linear.

    Expects params packed by prepare_params() (bf16 weights, f32 [1,*] biases);
    raw f32 / 1-D params are also accepted (converted at trace time).
    """
    out_dtype = x.dtype
    B, d_in = x.shape
    hidden = w1.shape[1]
    d_out = w2.shape[1]

    # Trace-time guards; no-ops when params were packed with prepare_params().
    if w1.dtype != jnp.bfloat16:
        w1 = w1.astype(jnp.bfloat16)
    if w2.dtype != jnp.bfloat16:
        w2 = w2.astype(jnp.bfloat16)
    if b1.ndim == 1:
        b1 = b1.reshape(1, hidden)
    if b2.ndim == 1:
        b2 = b2.reshape(1, d_out)
    b1 = b1.astype(jnp.float32)
    b2 = b2.astype(jnp.float32)

    # ---- batch tiling ----------------------------------------------------
    b_pad = _round_up(B, 8)
    n_steps = max(1, pl.cdiv(b_pad, block_b))
    # v7x has 2 TensorCores: keep an even grid length whenever we tile so the
    # ("parallel",) axis can use both cores; one extra ~0.35us step on v5e/v6e.
    if n_steps > 1 and n_steps % 2:
        n_steps += 1
    tb = _round_up(pl.cdiv(b_pad, n_steps), 8)
    b_pad = tb * n_steps
    if b_pad != B:
        x = jnp.pad(x, ((0, b_pad - B), (0, 0)))

    flops = 2 * b_pad * (d_in * hidden + hidden * d_out)
    bytes_accessed = (
        b_pad * d_in * x.dtype.itemsize
        + w1.size * w1.dtype.itemsize
        + w2.size * w2.dtype.itemsize
        + b1.size * 4 + b2.size * 4
        + b_pad * d_out * jnp.dtype(out_dtype).itemsize
    )

    out = pl.pallas_call(
        _mlp_kernel,
        out_shape=jax.ShapeDtypeStruct((b_pad, d_out), out_dtype),
        grid=(n_steps,),
        in_specs=[
            # x walks the batch axis (double-buffered by default).
            pl.BlockSpec((tb, d_in), lambda i: (i, 0)),
            # Weights/biases: constant index_map -> VMEM-resident, no re-DMA,
            # and single-buffered (no wasted second buffer).
            pl.BlockSpec((d_in, hidden), lambda i: (0, 0),
                         pipeline_mode=pl.Buffered(1)),
            pl.BlockSpec((1, hidden), lambda i: (0, 0),
                         pipeline_mode=pl.Buffered(1)),
            pl.BlockSpec((hidden, d_out), lambda i: (0, 0),
                         pipeline_mode=pl.Buffered(1)),
            pl.BlockSpec((1, d_out), lambda i: (0, 0),
                         pipeline_mode=pl.Buffered(1)),
        ],
        out_specs=pl.BlockSpec((tb, d_out), lambda i: (i, 0)),
        compiler_params=pltpu.CompilerParams(
            dimension_semantics=("parallel",)),
        cost_estimate=pl.CostEstimate(
            flops=flops, transcendentals=0, bytes_accessed=bytes_accessed),
    )(x, w1, b1, w2, b2)

    return out[:B] if b_pad != B else out


def init_params(key, input_dim=512, hidden_dim=128, output_dim=128):
    """Mimics PyTorch nn.Linear default init U(-1/sqrt(fan_in), 1/sqrt(fan_in))."""
    k1, k2, k3, k4 = jax.random.split(key, 4)
    bound1 = 1.0 / jnp.sqrt(input_dim)
    bound2 = 1.0 / jnp.sqrt(hidden_dim)
    w1 = jax.random.uniform(k1, (input_dim, hidden_dim), jnp.float32, -bound1, bound1)
    b1 = jax.random.uniform(k2, (hidden_dim,), jnp.float32, -bound1, bound1)
    w2 = jax.random.uniform(k3, (hidden_dim, output_dim), jnp.float32, -bound2, bound2)
    b2 = jax.random.uniform(k4, (output_dim,), jnp.float32, -bound2, bound2)
    return w1, b1, w2, b2


if __name__ == "__main__":
    key = jax.random.PRNGKey(0)
    kx, kp = jax.random.split(key)

    # Dims from the module defaults; modest batch for the self-test.
    B, D_IN, HIDDEN, D_OUT = 256, 512, 128, 128
    x = jax.random.normal(kx, (B, D_IN), dtype=jnp.float32)
    w1_f32, b1_f32, w2_f32, b2_f32 = init_params(kp, D_IN, HIDDEN, D_OUT)

    # One-time parameter packing (bf16 weights, f32 2-D biases).
    w1, b1, w2, b2 = prepare_params(w1_f32, b1_f32, w2_f32, b2_f32)

    out = projection_head(x, w1, b1, w2, b2)
    out = jax.block_until_ready(out)
    assert out.shape == (B, D_OUT)
    assert out.dtype == jnp.float32

    # Reference with the same mixed-precision scheme (tight tolerance).
    xb = x.astype(jnp.bfloat16)
    h_ref = jnp.maximum(
        jnp.dot(xb, w1, preferred_element_type=jnp.float32) + b1_f32, 0.0)
    ref_mixed = jnp.dot(h_ref.astype(jnp.bfloat16), w2,
                        preferred_element_type=jnp.float32) + b2_f32
    assert jnp.allclose(out, ref_mixed, atol=2e-3, rtol=2e-3)

    # Sanity check against the full-f32 PyTorch-equivalent math (loose tolerance
    # because weights/activations are carried in bf16).
    ref_f32 = jnp.maximum(x @ w1_f32 + b1_f32, 0.0) @ w2_f32 + b2_f32
    assert jnp.allclose(out, ref_f32, atol=5e-2, rtol=5e-2)

    print("KERNEL_OK")
</pallas_src>

<mosaic_0001>
module attributes {stable_mosaic.version = 11 : i64} {
  func.func @_mlp_kernel(%arg0: i32, %arg1: memref<256x512xf32, #tpu.memory_space<vmem>>, %arg2: memref<512x128xbf16, #tpu.memory_space<vmem>>, %arg3: memref<1x128xf32, #tpu.memory_space<vmem>>, %arg4: memref<128x128xbf16, #tpu.memory_space<vmem>>, %arg5: memref<1x128xf32, #tpu.memory_space<vmem>>, %arg6: memref<256x128xf32, #tpu.memory_space<vmem>>) attributes {dimension_semantics = [#tpu.dimension_semantics<parallel>], iteration_bounds = array<i64: 1>, scalar_prefetch = 0 : i64, scratch_operands = 0 : i64, tpu.core_type = #tpu.core_type<tc>, window_params = [{transform_indices = @transform_0, window_bounds = array<i64: 256, 512>}, {pipeline_mode = #tpu.pipeline_mode<synchronous>, transform_indices = @transform_1, window_bounds = array<i64: 512, 128>}, {pipeline_mode = #tpu.pipeline_mode<synchronous>, transform_indices = @transform_2, window_bounds = array<i64: 1, 128>}, {pipeline_mode = #tpu.pipeline_mode<synchronous>, transform_indices = @transform_3, window_bounds = array<i64: 128, 128>}, {pipeline_mode = #tpu.pipeline_mode<synchronous>, transform_indices = @transform_4, window_bounds = array<i64: 1, 128>}, {transform_indices = @transform_5, window_bounds = array<i64: 256, 128>}]} {
    %c0 = arith.constant 0 : index
    %c0_0 = arith.constant 0 : index
    %0 = vector.load %arg1[%c0, %c0_0] : memref<256x512xf32, #tpu.memory_space<vmem>>, vector<256x512xf32>
    %1 = arith.truncf %0 : vector<256x512xf32> to vector<256x512xbf16>
    %c0_1 = arith.constant 0 : index
    %c0_2 = arith.constant 0 : index
    %2 = vector.load %arg2[%c0_1, %c0_2] : memref<512x128xbf16, #tpu.memory_space<vmem>>, vector<512x128xbf16>
    %cst = arith.constant dense<0.000000e+00> : vector<256x128xf32>
    %3 = tpu.matmul %1, %2, %cst {dimension_numbers = #tpu.dot_dimension_numbers<[1], [0], [0], [1], [0, 0, 1, 1], [], []>} : vector<256x512xbf16>, vector<512x128xbf16>, vector<256x128xf32> -> vector<256x128xf32>
    %c0_3 = arith.constant 0 : index
    %c0_4 = arith.constant 0 : index
    %4 = vector.load %arg3[%c0_3, %c0_4] : memref<1x128xf32, #tpu.memory_space<vmem>>, vector<1x128xf32>
    %5 = vector.broadcast %4 : vector<1x128xf32> to vector<256x128xf32>
    %6 = arith.addf %3, %5 : vector<256x128xf32>
    %cst_5 = arith.constant 0.000000e+00 : f32
    %7 = vector.broadcast %cst_5 : f32 to vector<256x128xf32>
    %8 = arith.maximumf %6, %7 : vector<256x128xf32>
    %9 = arith.truncf %8 : vector<256x128xf32> to vector<256x128xbf16>
    %c0_6 = arith.constant 0 : index
    %c0_7 = arith.constant 0 : index
    %10 = vector.load %arg4[%c0_6, %c0_7] : memref<128x128xbf16, #tpu.memory_space<vmem>>, vector<128x128xbf16>
    %cst_8 = arith.constant dense<0.000000e+00> : vector<256x128xf32>
    %11 = tpu.matmul %9, %10, %cst_8 {dimension_numbers = #tpu.dot_dimension_numbers<[1], [0], [0], [1], [0, 0, 1, 1], [], []>} : vector<256x128xbf16>, vector<128x128xbf16>, vector<256x128xf32> -> vector<256x128xf32>
    %c0_9 = arith.constant 0 : index
    %c0_10 = arith.constant 0 : index
    %12 = vector.load %arg5[%c0_9, %c0_10] : memref<1x128xf32, #tpu.memory_space<vmem>>, vector<1x128xf32>
    %13 = vector.broadcast %12 : vector<1x128xf32> to vector<256x128xf32>
    %14 = arith.addf %11, %13 : vector<256x128xf32>
    %c0_11 = arith.constant 0 : index
    %c0_12 = arith.constant 0 : index
    %15 = vector.load %arg6[%c0_11, %c0_12] : memref<256x128xf32, #tpu.memory_space<vmem>>, vector<256x128xf32>
    tpu.vector_store %arg6[%c0_11, %c0_12], %14 {strides = array<i32>} : memref<256x128xf32, #tpu.memory_space<vmem>>, vector<256x128xf32>,
    return
  }
  func.func @transform_0(%arg0: i32) -> (i32, i32) {
    %c0_i32 = arith.constant 0 : i32
    %c0_i32_0 = arith.constant 0 : i32
    return %arg0, %c0_i32 : i32, i32
  }
  func.func @transform_1(%arg0: i32) -> (i32, i32) {
    %c0_i32 = arith.constant 0 : i32
    %c0_i32_0 = arith.constant 0 : i32
    %c0_i32_1 = arith.constant 0 : i32
    return %c0_i32, %c0_i32_0 : i32, i32
  }
  func.func @transform_2(%arg0: i32) -> (i32, i32) {
    %c0_i32 = arith.constant 0 : i32
    %c0_i32_0 = arith.constant 0 : i32
    %c0_i32_1 = arith.constant 0 : i32
    return %c0_i32, %c0_i32_0 : i32, i32
  }
  func.func @transform_3(%arg0: i32) -> (i32, i32) {
    %c0_i32 = arith.constant 0 : i32
    %c0_i32_0 = arith.constant 0 : i32
    %c0_i32_1 = arith.constant 0 : i32
    return %c0_i32, %c0_i32_0 : i32, i32
  }
  func.func @transform_4(%arg0: i32) -> (i32, i32) {
    %c0_i32 = arith.constant 0 : i32
    %c0_i32_0 = arith.constant 0 : i32
    %c0_i32_1 = arith.constant 0 : i32
    return %c0_i32, %c0_i32_0 : i32, i32
  }
  func.func @transform_5(%arg0: i32) -> (i32, i32) {
    %c0_i32 = arith.constant 0 : i32
    %c0_i32_0 = arith.constant 0 : i32
    return %arg0, %c0_i32 : i32, i32
  }
}

</mosaic_0001>

<llo_original>
// kernel: projection_head.1
$region0: #{projection_head.1}
  #allocation0 [shape = 'u32[]', space=smem, size = 0x4, offset = 0x4, fixed_abs, tag = 'smem constant byte address 0x4 - core index']
  #allocation1 [shape = 'u32[144,128]{1,0:T(1,128)}', space=vmem, size = 0x12000, scoped, tag = 'internal scratch']
  %s0 = inlined_call_operand.hbm [shape: f32[256,512], index: 0, kind: input, shape index: {}]
  %s1 = inlined_call_operand.hbm [shape: bf16[512,128], index: 1, kind: input, shape index: {}]
  %s2 = inlined_call_operand.vmem [shape: f32[1,128], index: 2, kind: input, shape index: {}]
  %s3 = inlined_call_operand.hbm [shape: bf16[128,128], index: 3, kind: input, shape index: {}]
  %s4 = inlined_call_operand.vmem [shape: f32[1,128], index: 4, kind: input, shape index: {}]
  %s5 = inlined_call_operand.hbm [shape: f32[256,128], index: 5, kind: output, shape index: {}]
  %s6 = sld [smem:[#allocation0]]
  $region42: #{projection_head.1} parent=0
    _
  %s8 = ssub.s32 1, %s6
  %s9 = scalar_select 0, %s8, %s6
  $region1: #{projection_head.1} parent=0
    #allocation2 [shape = 'u8[524288]{0}', space=vmem, size = 0x80000, scoped, tag = 'input window, operand 0, single buffered']
    #allocation3 [shape = 's32[1]{0}', space=sflag, size = 0x4, scoped, tag = 'scoped memory for projection_head.1']
    #allocation4 [shape = 's32[1]{0}', space=sflag, size = 0x4, scoped, tag = 'scoped memory for projection_head.1']
    #allocation5 [shape = 'u8[131072]{0}', space=vmem, size = 0x20000, scoped, tag = 'input window, operand 1, single buffered']
    #allocation6 [shape = 's32[1]{0}', space=sflag, size = 0x4, scoped, tag = 'scoped memory for projection_head.1']
    #allocation7 [shape = 'u8[32768]{0}', space=vmem, size = 0x8000, scoped, tag = 'input window, operand 3, single buffered']
    #allocation8 [shape = 'u8[131072]{0}', space=vmem, size = 0x20000, scoped, tag = 'output window, operand 0, single buffered']
    %10 = vsyncpa [#allocation3], 0
    %11 = vsyncpa [#allocation6], 0
    %12 = vsyncpa [#allocation4], 0
    // Predicated region
    $region2: #{projection_head.1} parent=1 // pred_check
      _
    $region3: #{projection_head.1} parent=1 // pred_check_branch
      %14 = sbr.rel (0) target = $region5
    $region4: #{projection_head.1} parent=1 // pred_region
      %s16 = ssub.s32 16384, 16384
      %17 = vsyncadd [#allocation3], %s16
      %s18 = sshll.u32 [#allocation2], 4
      %s19 = int_to_ptr.vmem [resolvable:$true] %s18
      %24 = dma.hbm_to_vmem [thread:$0]  %s0, 16384, %s19, [#allocation3], 512, 512, 32
    $region5: #{projection_head.1} parent=1 // pred_fallthru
      _
    // Predicated region
    $region6: #{projection_head.1} parent=1 // pred_check
      _
    $region7: #{projection_head.1} parent=1 // pred_check_branch
      %26 = sbr.rel (0) target = $region9
    $region8: #{projection_head.1} parent=1 // pred_region
      %s28 = ssub.s32 4096, 4096
      %29 = vsyncadd [#allocation6], %s28
      %s30 = sshll.u32 [#allocation5], 4
      %s31 = int_to_ptr.vmem [resolvable:$true] %s30
      %36 = dma.hbm_to_vmem [thread:$0]  %s1, 4096, %s31, [#allocation6], 64, 64, 4
    $region9: #{projection_head.1} parent=1 // pred_fallthru
      _
    // Predicated region
    $region10: #{projection_head.1} parent=1 // pred_check
      _
    $region11: #{projection_head.1} parent=1 // pred_check_branch
      %38 = sbr.rel (0) target = $region13
    $region12: #{projection_head.1} parent=1 // pred_region
      _
    $region13: #{projection_head.1} parent=1 // pred_fallthru
      _
    // Predicated region
    $region14: #{projection_head.1} parent=1 // pred_check
      _
    $region15: #{projection_head.1} parent=1 // pred_check_branch
      %40 = sbr.rel (0) target = $region17
    $region16: #{projection_head.1} parent=1 // pred_region
      %s42 = ssub.s32 1024, 1024
      %43 = vsyncadd [#allocation6], %s42
      %s44 = sshll.u32 [#allocation7], 4
      %s45 = int_to_ptr.vmem [resolvable:$true] %s44
      %50 = dma.hbm_to_vmem [thread:$0]  %s3, 1024, %s45, [#allocation6], 64, 64, 4
    $region17: #{projection_head.1} parent=1 // pred_fallthru
      _
    // Predicated region
    $region18: #{projection_head.1} parent=1 // pred_check
      _
    $region19: #{projection_head.1} parent=1 // pred_check_branch
      %52 = sbr.rel (0) target = $region21
    $region20: #{projection_head.1} parent=1 // pred_region
      _
    $region21: #{projection_head.1} parent=1 // pred_fallthru
      _
    // Predicated region
    $region22: #{projection_head.1} parent=1 // pred_check
      _
    $region23: #{projection_head.1} parent=1 // pred_check_branch
      %54 = sbr.rel (0) target = $region25
    $region24: #{projection_head.1} parent=1 // pred_region
      %55 = dma.done [#allocation3], 16384
    $region25: #{projection_head.1} parent=1 // pred_fallthru
      _
    // Predicated region
    $region26: #{projection_head.1} parent=1 // pred_check
      _
    $region27: #{projection_head.1} parent=1 // pred_check_branch
      %57 = sbr.rel (0) target = $region29
    $region28: #{projection_head.1} parent=1 // pred_region
      %58 = dma.done [#allocation6], 4096
    $region29: #{projection_head.1} parent=1 // pred_fallthru
      _
    // Predicated region
    $region30: #{projection_head.1} parent=1 // pred_check
      _
    $region31: #{projection_head.1} parent=1 // pred_check_branch
      %60 = sbr.rel (0) target = $region33
    $region32: #{projection_head.1} parent=1 // pred_region
      %61 = dma.done [#allocation6], 1024
    $region33: #{projection_head.1} parent=1 // pred_fallthru
      _
    %v63 = vld [vmem:[#allocation2] sm:$0xff]
    %v64 = vld [vmem:[#allocation2 + $0x8] sm:$0xff]
    %v65 = vld [vmem:[#allocation2 + $0x10] sm:$0xff]
    %v66 = vld [vmem:[#allocation2 + $0x18] sm:$0xff]
    %v67 = vld [vmem:[#allocation2 + $0x20] sm:$0xff]
    %v68 = vld [vmem:[#allocation2 + $0x28] sm:$0xff]
    %v69 = vld [vmem:[#allocation2 + $0x30] sm:$0xff]
    %v70 = vld [vmem:[#allocation2 + $0x38] sm:$0xff]
    %v71 = vld [vmem:[#allocation2 + $0x40] sm:$0xff]
    %v72 = vld [vmem:[#allocation2 + $0x48] sm:$0xff]
    %v73 = vld [vmem:[#allocation2 + $0x50] sm:$0xff]
    %v74 = vld [vmem:[#allocation2 + $0x58] sm:$0xff]
    %v75 = vld [vmem:[#allocation2 + $0x60] sm:$0xff]
    %v76 = vld [vmem:[#allocation2 + $0x68] sm:$0xff]
    %v77 = vld [vmem:[#allocation2 + $0x70] sm:$0xff]
    %v78 = vld [vmem:[#allocation2 + $0x78] sm:$0xff]
    %v79 = vld [vmem:[#allocation2 + $0x80] sm:$0xff]
    %v80 = vld [vmem:[#allocation2 + $0x88] sm:$0xff]
    %v81 = vld [vmem:[#allocation2 + $0x90] sm:$0xff]
    %v82 = vld [vmem:[#allocation2 + $0x98] sm:$0xff]
    %v83 = vld [vmem:[#allocation2 + $0xa0] sm:$0xff]
    %v84 = vld [vmem:[#allocation2 + $0xa8] sm:$0xff]
    %v85 = vld [vmem:[#allocation2 + $0xb0] sm:$0xff]
    %v86 = vld [vmem:[#allocation2 + $0xb8] sm:$0xff]
    %v87 = vld [vmem:[#allocation2 + $0xc0] sm:$0xff]
    %v88 = vld [vmem:[#allocation2 + $0xc8] sm:$0xff]
    %v89 = vld [vmem:[#allocation2 + $0xd0] sm:$0xff]
    %v90 = vld [vmem:[#allocation2 + $0xd8] sm:$0xff]
    %v91 = vld [vmem:[#allocation2 + $0xe0] sm:$0xff]
    %v92 = vld [vmem:[#allocation2 + $0xe8] sm:$0xff]
    %v93 = vld [vmem:[#allocation2 + $0xf0] sm:$0xff]
    %v94 = vld [vmem:[#allocation2 + $0xf8] sm:$0xff]
    %v95 = vld [vmem:[#allocation2 + $0x100] sm:$0xff]
    %v96 = vld [vmem:[#allocation2 + $0x108] sm:$0xff]
    %v97 = vld [vmem:[#allocation2 + $0x110] sm:$0xff]
    %v98 = vld [vmem:[#allocation2 + $0x118] sm:$0xff]
    %v99 = vld [vmem:[#allocation2 + $0x120] sm:$0xff]
    %v100 = vld [vmem:[#allocation2 + $0x128] sm:$0xff]
    %v101 = vld [vmem:[#allocation2 + $0x130] sm:$0xff]
    %v102 = vld [vmem:[#allocation2 + $0x138] sm:$0xff]
    %v103 = vld [vmem:[#allocation2 + $0x140] sm:$0xff]
    %v104 = vld [vmem:[#allocation2 + $0x148] sm:$0xff]
    %v105 = vld [vmem:[#allocation2 + $0x150] sm:$0xff]
    %v106 = vld [vmem:[#allocation2 + $0x158] sm:$0xff]
    %v107 = vld [vmem:[#allocation2 + $0x160] sm:$0xff]
    %v108 = vld [vmem:[#allocation2 + $0x168] sm:$0xff]
    %v109 = vld [vmem:[#allocation2 + $0x170] sm:$0xff]
    %v110 = vld [vmem:[#allocation2 + $0x178] sm:$0xff]
    %v111 = vld [vmem:[#allocation2 + $0x180] sm:$0xff]
    %v112 = vld [vmem:[#allocation2 + $0x188] sm:$0xff]
    %v113 = vld [vmem:[#allocation2 + $0x190] sm:$0xff]
    %v114 = vld [vmem:[#allocation2 + $0x198] sm:$0xff]
    %v115 = vld [vmem:[#allocation2 + $0x1a0] sm:$0xff]
    %v116 = vld [vmem:[#allocation2 + $0x1a8] sm:$0xff]
    %v117 = vld [vmem:[#allocation2 + $0x1b0] sm:$0xff]
    %v118 = vld [vmem:[#allocation2 + $0x1b8] sm:$0xff]
    %v119 = vld [vmem:[#allocation2 + $0x1c0] sm:$0xff]
    %v120 = vld [vmem:[#allocation2 + $0x1c8] sm:$0xff]
    %v121 = vld [vmem:[#allocation2 + $0x1d0] sm:$0xff]
    %v122 = vld [vmem:[#allocation2 + $0x1d8] sm:$0xff]
    %v123 = vld [vmem:[#allocation2 + $0x1e0] sm:$0xff]
    %v124 = vld [vmem:[#allocation2 + $0x1e8] sm:$0xff]
    %v125 = vld [vmem:[#allocation2 + $0x1f0] sm:$0xff]
    %v126 = vld [vmem:[#allocation2 + $0x1f8] sm:$0xff]
    %v127 = vld [vmem:[#allocation2 + $0x200] sm:$0xff]
    %v128 = vld [vmem:[#allocation2 + $0x208] sm:$0xff]
    %v129 = vld [vmem:[#allocation2 + $0x210] sm:$0xff]
    %v130 = vld [vmem:[#allocation2 + $0x218] sm:$0xff]
    %v131 = vld [vmem:[#allocation2 + $0x220] sm:$0xff]
    %v132 = vld [vmem:[#allocation2 + $0x228] sm:$0xff]
    %v133 = vld [vmem:[#allocation2 + $0x230] sm:$0xff]
    %v134 = vld [vmem:[#allocation2 + $0x238] sm:$0xff]
    %v135 = vld [vmem:[#allocation2 + $0x240] sm:$0xff]
    %v136 = vld [vmem:[#allocation2 + $0x248] sm:$0xff]
    %v137 = vld [vmem:[#allocation2 + $0x250] sm:$0xff]
    %v138 = vld [vmem:[#allocation2 + $0x258] sm:$0xff]
    %v139 = vld [vmem:[#allocation2 + $0x260] sm:$0xff]
    %v140 = vld [vmem:[#allocation2 + $0x268] sm:$0xff]
    %v141 = vld [vmem:[#allocation2 + $0x270] sm:$0xff]
    %v142 = vld [vmem:[#allocation2 + $0x278] sm:$0xff]
    %v143 = vld [vmem:[#allocation2 + $0x280] sm:$0xff]
    %v144 = vld [vmem:[#allocation2 + $0x288] sm:$0xff]
    %v145 = vld [vmem:[#allocation2 + $0x290] sm:$0xff]
    %v146 = vld [vmem:[#allocation2 + $0x298] sm:$0xff]
    %v147 = vld [vmem:[#allocation2 + $0x2a0] sm:$0xff]
    %v148 = vld [vmem:[#allocation2 + $0x2a8] sm:$0xff]
    %v149 = vld [vmem:[#allocation2 + $0x2b0] sm:$0xff]
    %v150 = vld [vmem:[#allocation2 + $0x2b8] sm:$0xff]
    %v151 = vld [vmem:[#allocation2 + $0x2c0] sm:$0xff]
    %v152 = vld [vmem:[#allocation2 + $0x2c8] sm:$0xff]
    %v153 = vld [vmem:[#allocation2 + $0x2d0] sm:$0xff]
    %v154 = vld [vmem:[#allocation2 + $0x2d8] sm:$0xff]
    %v155 = vld [vmem:[#allocation2 + $0x2e0] sm:$0xff]
    %v156 = vld [vmem:[#allocation2 + $0x2e8] sm:$0xff]
    %v157 = vld [vmem:[#allocation2 + $0x2f0] sm:$0xff]
    %v158 = vld [vmem:[#allocation2 + $0x2f8] sm:$0xff]
    %v159 = vld [vmem:[#allocation2 + $0x300] sm:$0xff]
    %v160 = vld [vmem:[#allocation2 + $0x308] sm:$0xff]
    %v161 = vld [vmem:[#allocation2 + $0x310] sm:$0xff]
    %v162 = vld [vmem:[#allocation2 + $0x318] sm:$0xff]
    %v163 = vld [vmem:[#allocation2 + $0x320] sm:$0xff]
    %v164 = vld [vmem:[#allocation2 + $0x328] sm:$0xff]
    %v165 = vld [vmem:[#allocation2 + $0x330] sm:$0xff]
    %v166 = vld [vmem:[#allocation2 + $0x338] sm:$0xff]
    %v167 = vld [vmem:[#allocation2 + $0x340] sm:$0xff]
    %v168 = vld [vmem:[#allocation2 + $0x348] sm:$0xff]
    %v169 = vld [vmem:[#allocation2 + $0x350] sm:$0xff]
    %v170 = vld [vmem:[#allocation2 + $0x358] sm:$0xff]
    %v171 = vld [vmem:[#allocation2 + $0x360] sm:$0xff]
    %v172 = vld [vmem:[#allocation2 + $0x368] sm:$0xff]
    %v173 = vld [vmem:[#allocation2 + $0x370] sm:$0xff]
    %v174 = vld [vmem:[#allocation2 + $0x378] sm:$0xff]
    %v175 = vld [vmem:[#allocation2 + $0x380] sm:$0xff]
    %v176 = vld [vmem:[#allocation2 + $0x388] sm:$0xff]
    %v177 = vld [vmem:[#allocation2 + $0x390] sm:$0xff]
    %v178 = vld [vmem:[#allocation2 + $0x398] sm:$0xff]
    %v179 = vld [vmem:[#allocation2 + $0x3a0] sm:$0xff]
    %v180 = vld [vmem:[#allocation2 + $0x3a8] sm:$0xff]
    %v181 = vld [vmem:[#allocation2 + $0x3b0] sm:$0xff]
    %v182 = vld [vmem:[#allocation2 + $0x3b8] sm:$0xff]
    %v183 = vld [vmem:[#allocation2 + $0x3c0] sm:$0xff]
    %v184 = vld [vmem:[#allocation2 + $0x3c8] sm:$0xff]
    %v185 = vld [vmem:[#allocation2 + $0x3d0] sm:$0xff]
    %v186 = vld [vmem:[#allocation2 + $0x3d8] sm:$0xff]
    %v187 = vld [vmem:[#allocation2 + $0x3e0] sm:$0xff]
    %v188 = vld [vmem:[#allocation2 + $0x3e8] sm:$0xff]
    %v189 = vld [vmem:[#allocation2 + $0x3f0] sm:$0xff]
    %v190 = vld [vmem:[#allocation2 + $0x3f8] sm:$0xff]
    %v191 = vpack.c.bf16 %v67, %v63
    %v192 = vpack.c.bf16 %v68, %v64
    %v193 = vpack.c.bf16 %v69, %v65
    %v194 = vpack.c.bf16 %v70, %v66
    %v195 = vpack.c.bf16 %v75, %v71
    %v196 = vpack.c.bf16 %v76, %v72
    %v197 = vpack.c.bf16 %v77, %v73
    %v198 = vpack.c.bf16 %v78, %v74
    %v199 = vpack.c.bf16 %v83, %v79
    %v200 = vpack.c.bf16 %v84, %v80
    %v201 = vpack.c.bf16 %v85, %v81
    %v202 = vpack.c.bf16 %v86, %v82
    %v203 = vpack.c.bf16 %v91, %v87
    %v204 = vpack.c.bf16 %v92, %v88
    %v205 = vpack.c.bf16 %v93, %v89
    %v206 = vpack.c.bf16 %v94, %v90
    %v207 = vpack.c.bf16 %v99, %v95
    %v208 = vpack.c.bf16 %v100, %v96
    %v209 = vpack.c.bf16 %v101, %v97
    %v210 = vpack.c.bf16 %v102, %v98
    %v211 = vpack.c.bf16 %v107, %v103
    %v212 = vpack.c.bf16 %v108, %v104
    %v213 = vpack.c.bf16 %v109, %v105
    %v214 = vpack.c.bf16 %v110, %v106
    %v215 = vpack.c.bf16 %v115, %v111
    %v216 = vpack.c.bf16 %v116, %v112
    %v217 = vpack.c.bf16 %v117, %v113
    %v218 = vpack.c.bf16 %v118, %v114
    %v219 = vpack.c.bf16 %v123, %v119
    %v220 = vpack.c.bf16 %v124, %v120
    %v221 = vpack.c.bf16 %v125, %v121
    %v222 = vpack.c.bf16 %v126, %v122
    %v223 = vpack.c.bf16 %v131, %v127
    %v224 = vpack.c.bf16 %v132, %v128
    %v225 = vpack.c.bf16 %v133, %v129
    %v226 = vpack.c.bf16 %v134, %v130
    %v227 = vpack.c.bf16 %v139, %v135
    %v228 = vpack.c.bf16 %v140, %v136
    %v229 = vpack.c.bf16 %v141, %v137
    %v230 = vpack.c.bf16 %v142, %v138
    %v231 = vpack.c.bf16 %v147, %v143
    %v232 = vpack.c.bf16 %v148, %v144
    %v233 = vpack.c.bf16 %v149, %v145
    %v234 = vpack.c.bf16 %v150, %v146
    %v235 = vpack.c.bf16 %v155, %v151
    %v236 = vpack.c.bf16 %v156, %v152
    %v237 = vpack.c.bf16 %v157, %v153
    %v238 = vpack.c.bf16 %v158, %v154
    %v239 = vpack.c.bf16 %v163, %v159
    %v240 = vpack.c.bf16 %v164, %v160
    %v241 = vpack.c.bf16 %v165, %v161
    %v242 = vpack.c.bf16 %v166, %v162
    %v243 = vpack.c.bf16 %v171, %v167
    %v244 = vpack.c.bf16 %v172, %v168
    %v245 = vpack.c.bf16 %v173, %v169
    %v246 = vpack.c.bf16 %v174, %v170
    %v247 = vpack.c.bf16 %v179, %v175
    %v248 = vpack.c.bf16 %v180, %v176
    %v249 = vpack.c.bf16 %v181, %v177
    %v250 = vpack.c.bf16 %v182, %v178
    %v251 = vpack.c.bf16 %v187, %v183
    %v252 = vpack.c.bf16 %v188, %v184
    %v253 = vpack.c.bf16 %v189, %v185
    %v254 = vpack.c.bf16 %v190, %v186
    %v255 = vld [vmem:[#allocation5] sm:$0xf]
    %v256 = vld [vmem:[#allocation5 + $0x4] sm:$0xf]
    %v257 = vld [vmem:[#allocation5 + $0x8] sm:$0xf]
    %v258 = vld [vmem:[#allocation5 + $0xc] sm:$0xf]
    %v259 = vld [vmem:[#allocation5 + $0x10] sm:$0xf]
    %v260 = vld [vmem:[#allocation5 + $0x14] sm:$0xf]
    %v261 = vld [vmem:[#allocation5 + $0x18] sm:$0xf]
    %v262 = vld [vmem:[#allocation5 + $0x1c] sm:$0xf]
    %v263 = vld [vmem:[#allocation5 + $0x20] sm:$0xf]
    %v264 = vld [vmem:[#allocation5 + $0x24] sm:$0xf]
    %v265 = vld [vmem:[#allocation5 + $0x28] sm:$0xf]
    %v266 = vld [vmem:[#allocation5 + $0x2c] sm:$0xf]
    %v267 = vld [vmem:[#allocation5 + $0x30] sm:$0xf]
    %v268 = vld [vmem:[#allocation5 + $0x34] sm:$0xf]
    %v269 = vld [vmem:[#allocation5 + $0x38] sm:$0xf]
    %v270 = vld [vmem:[#allocation5 + $0x3c] sm:$0xf]
    %v271 = vld [vmem:[#allocation5 + $0x40] sm:$0xf]
    %v272 = vld [vmem:[#allocation5 + $0x44] sm:$0xf]
    %v273 = vld [vmem:[#allocation5 + $0x48] sm:$0xf]
    %v274 = vld [vmem:[#allocation5 + $0x4c] sm:$0xf]
    %v275 = vld [vmem:[#allocation5 + $0x50] sm:$0xf]
    %v276 = vld [vmem:[#allocation5 + $0x54] sm:$0xf]
    %v277 = vld [vmem:[#allocation5 + $0x58] sm:$0xf]
    %v278 = vld [vmem:[#allocation5 + $0x5c] sm:$0xf]
    %v279 = vld [vmem:[#allocation5 + $0x60] sm:$0xf]
    %v280 = vld [vmem:[#allocation5 + $0x64] sm:$0xf]
    %v281 = vld [vmem:[#allocation5 + $0x68] sm:$0xf]
    %v282 = vld [vmem:[#allocation5 + $0x6c] sm:$0xf]
    %v283 = vld [vmem:[#allocation5 + $0x70] sm:$0xf]
    %v284 = vld [vmem:[#allocation5 + $0x74] sm:$0xf]
    %v285 = vld [vmem:[#allocation5 + $0x78] sm:$0xf]
    %v286 = vld [vmem:[#allocation5 + $0x7c] sm:$0xf]
    %v287 = vld [vmem:[#allocation5 + $0x80] sm:$0xf]
    %v288 = vld [vmem:[#allocation5 + $0x84] sm:$0xf]
    %v289 = vld [vmem:[#allocation5 + $0x88] sm:$0xf]
    %v290 = vld [vmem:[#allocation5 + $0x8c] sm:$0xf]
    %v291 = vld [vmem:[#allocation5 + $0x90] sm:$0xf]
    %v292 = vld [vmem:[#allocation5 + $0x94] sm:$0xf]
    %v293 = vld [vmem:[#allocation5 + $0x98] sm:$0xf]
    %v294 = vld [vmem:[#allocation5 + $0x9c] sm:$0xf]
    %v295 = vld [vmem:[#allocation5 + $0xa0] sm:$0xf]
    %v296 = vld [vmem:[#allocation5 + $0xa4] sm:$0xf]
    %v297 = vld [vmem:[#allocation5 + $0xa8] sm:$0xf]
    %v298 = vld [vmem:[#allocation5 + $0xac] sm:$0xf]
    %v299 = vld [vmem:[#allocation5 + $0xb0] sm:$0xf]
    %v300 = vld [vmem:[#allocation5 + $0xb4] sm:$0xf]
    %v301 = vld [vmem:[#allocation5 + $0xb8] sm:$0xf]
    %v302 = vld [vmem:[#allocation5 + $0xbc] sm:$0xf]
    %v303 = vld [vmem:[#allocation5 + $0xc0] sm:$0xf]
    %v304 = vld [vmem:[#allocation5 + $0xc4] sm:$0xf]
    %v305 = vld [vmem:[#allocation5 + $0xc8] sm:$0xf]
    %v306 = vld [vmem:[#allocation5 + $0xcc] sm:$0xf]
    %v307 = vld [vmem:[#allocation5 + $0xd0] sm:$0xf]
    %v308 = vld [vmem:[#allocation5 + $0xd4] sm:$0xf]
    %v309 = vld [vmem:[#allocation5 + $0xd8] sm:$0xf]
    %v310 = vld [vmem:[#allocation5 + $0xdc] sm:$0xf]
    %v311 = vld [vmem:[#allocation5 + $0xe0] sm:$0xf]
    %v312 = vld [vmem:[#allocation5 + $0xe4] sm:$0xf]
    %v313 = vld [vmem:[#allocation5 + $0xe8] sm:$0xf]
    %v314 = vld [vmem:[#allocation5 + $0xec] sm:$0xf]
    %v315 = vld [vmem:[#allocation5 + $0xf0] sm:$0xf]
    %v316 = vld [vmem:[#allocation5 + $0xf4] sm:$0xf]
    %v317 = vld [vmem:[#allocation5 + $0xf8] sm:$0xf]
    %v318 = vld [vmem:[#allocation5 + $0xfc] sm:$0xf]
    %v319 = vld [vmem:[%s2] sm:$0x1]
    %v321 = vlaneseq
    %v322 = vshrl.u32 %v321, 7
    %v323 = vsub.s32 0, %v322
    %v324 = vrot.slane %v319, %v323
    %v390 = vunpack.c.l.b16 %v255
    %v391 = vunpack.c.l.b16 %v256
    %v392 = vunpack.c.l.b16 %v257
    %v393 = vunpack.c.l.b16 %v258
    %v394 = vunpack.c.l.b16 %v259
    %v395 = vunpack.c.l.b16 %v260
    %v396 = vunpack.c.l.b16 %v261
    %v397 = vunpack.c.l.b16 %v262
    %v398 = vunpack.c.l.b16 %v263
    %v399 = vunpack.c.l.b16 %v264
    %v400 = vunpack.c.l.b16 %v265
    %v401 = vunpack.c.l.b16 %v266
    %v402 = vunpack.c.l.b16 %v267
    %v403 = vunpack.c.l.b16 %v268
    %v404 = vunpack.c.l.b16 %v269
    %v405 = vunpack.c.l.b16 %v270
    %v406 = vunpack.c.l.b16 %v271
    %v407 = vunpack.c.l.b16 %v272
    %v408 = vunpack.c.l.b16 %v273
    %v409 = vunpack.c.l.b16 %v274
    %v410 = vunpack.c.l.b16 %v275
    %v411 = vunpack.c.l.b16 %v276
    %v412 = vunpack.c.l.b16 %v277
    %v413 = vunpack.c.l.b16 %v278
    %v414 = vunpack.c.l.b16 %v279
    %v415 = vunpack.c.l.b16 %v280
    %v416 = vunpack.c.l.b16 %v281
    %v417 = vunpack.c.l.b16 %v282
    %v418 = vunpack.c.l.b16 %v283
    %v419 = vunpack.c.l.b16 %v284
    %v420 = vunpack.c.l.b16 %v285
    %v421 = vunpack.c.l.b16 %v286
    %v422 = vunpack.c.l.b16 %v287
    %v423 = vunpack.c.l.b16 %v288
    %v424 = vunpack.c.l.b16 %v289
    %v425 = vunpack.c.l.b16 %v290
    %v426 = vunpack.c.l.b16 %v291
    %v427 = vunpack.c.l.b16 %v292
    %v428 = vunpack.c.l.b16 %v293
    %v429 = vunpack.c.l.b16 %v294
    %v430 = vunpack.c.l.b16 %v295
    %v431 = vunpack.c.l.b16 %v296
    %v432 = vunpack.c.l.b16 %v297
    %v433 = vunpack.c.l.b16 %v298
    %v434 = vunpack.c.l.b16 %v299
    %v435 = vunpack.c.l.b16 %v300
    %v436 = vunpack.c.l.b16 %v301
    %v437 = vunpack.c.l.b16 %v302
    %v438 = vunpack.c.l.b16 %v303
    %v439 = vunpack.c.l.b16 %v304
    %v440 = vunpack.c.l.b16 %v305
    %v441 = vunpack.c.l.b16 %v306
    %v442 = vunpack.c.l.b16 %v307
    %v443 = vunpack.c.l.b16 %v308
    %v444 = vunpack.c.l.b16 %v309
    %v445 = vunpack.c.l.b16 %v310
    %v446 = vunpack.c.l.b16 %v311
    %v447 = vunpack.c.l.b16 %v312
    %v448 = vunpack.c.l.b16 %v313
    %v449 = vunpack.c.l.b16 %v314
    %v450 = vunpack.c.l.b16 %v315
    %v451 = vunpack.c.l.b16 %v316
    %v452 = vunpack.c.l.b16 %v317
    %v453 = vunpack.c.l.b16 %v318
    %v454 = vpack.c.b16 %v391, %v390
    %v455 = vpack.c.b16 %v393, %v392
    %v456 = vpack.c.b16 %v395, %v394
    %v457 = vpack.c.b16 %v397, %v396
    %v458 = vpack.c.b16 %v399, %v398
    %v459 = vpack.c.b16 %v401, %v400
    %v460 = vpack.c.b16 %v403, %v402
    %v461 = vpack.c.b16 %v405, %v404
    %v462 = vpack.c.b16 %v407, %v406
    %v463 = vpack.c.b16 %v409, %v408
    %v464 = vpack.c.b16 %v411, %v410
    %v465 = vpack.c.b16 %v413, %v412
    %v466 = vpack.c.b16 %v415, %v414
    %v467 = vpack.c.b16 %v417, %v416
    %v468 = vpack.c.b16 %v419, %v418
    %v469 = vpack.c.b16 %v421, %v420
    %v470 = vpack.c.b16 %v423, %v422
    %v471 = vpack.c.b16 %v425, %v424
    %v472 = vpack.c.b16 %v427, %v426
    %v473 = vpack.c.b16 %v429, %v428
    %v474 = vpack.c.b16 %v431, %v430
    %v475 = vpack.c.b16 %v433, %v432
    %v476 = vpack.c.b16 %v435, %v434
    %v477 = vpack.c.b16 %v437, %v436
    %v478 = vpack.c.b16 %v439, %v438
    %v479 = vpack.c.b16 %v441, %v440
    %v480 = vpack.c.b16 %v443, %v442
    %v481 = vpack.c.b16 %v445, %v444
    %v482 = vpack.c.b16 %v447, %v446
    %v483 = vpack.c.b16 %v449, %v448
    %v484 = vpack.c.b16 %v451, %v450
    %v485 = vpack.c.b16 %v453, %v452
    %518 = vmatprep.subr.bf16.mxu0 0
    %519 = vmatpush1.bf16.msra.mxu0 %v454
    %520 = vmatprep.subr.bf16.mxu0 0
    %521 = vmatpush1.bf16.msra.mxu0 %v455
    %522 = vmatprep.subr.bf16.mxu0 0
    %523 = vmatpush1.bf16.msra.mxu0 %v456
    %524 = vmatprep.subr.bf16.mxu0 0
    %525 = vmatpush1.bf16.msra.mxu0 %v457
    %526 = vmatprep.subr.bf16.mxu0 0
    %527 = vmatpush1.bf16.msra.mxu0 %v458
    %528 = vmatprep.subr.bf16.mxu0 0
    %529 = vmatpush1.bf16.msra.mxu0 %v459
    %530 = vmatprep.subr.bf16.mxu0 0
    %531 = vmatpush1.bf16.msra.mxu0 %v460
    %532 = vmatprep.subr.bf16.mxu0 0
    %533 = vmatpush1.bf16.msra.mxu0 %v461
    %534 = vmatprep.subr.bf16.mxu0 0
    %535 = vmatpush1.bf16.msra.mxu0 %v462
    %536 = vmatprep.subr.bf16.mxu0 0
    %537 = vmatpush1.bf16.msra.mxu0 %v463
    %538 = vmatprep.subr.bf16.mxu0 0
    %539 = vmatpush1.bf16.msra.mxu0 %v464
    %540 = vmatprep.subr.bf16.mxu0 0
    %541 = vmatpush1.bf16.msra.mxu0 %v465
    %542 = vmatprep.subr.bf16.mxu0 0
    %543 = vmatpush1.bf16.msra.mxu0 %v466
    %544 = vmatprep.subr.bf16.mxu0 0
    %545 = vmatpush1.bf16.msra.mxu0 %v467
    %546 = vmatprep.subr.bf16.mxu0 0
    %547 = vmatpush1.bf16.msra.mxu0 %v468
    %548 = vmatprep.subr.bf16.mxu0 0
    %549 = vmatpush1.bf16.msra.mxu0 %v469
    %550 = vmatprep.mubr.bf16.mxu0 %v192
    %551 = vmatmul.mubr.bf16.gmra.mrb[0].mxu0 %v191
    %v552 = vpop.f32.mrb[0].mxu0
    %v553 = vadd.f32 %v324, %v552
    %v554 = vpop.f32.mrb[0].mxu0
    %v555 = vpop.f32.mrb[0].mxu0
    %v556 = vadd.f32 %v324, %v555
    %v557 = vpop.f32.mrb[0].mxu0
    %558 = vmatprep.mubr.bf16.mxu0 %v196
    %559 = vmatmul.mubr.bf16.gmra.mrb[0].mxu0 %v195
    %v560 = vpop.f32.mrb[0].mxu0
    %v561 = vadd.f32 %v324, %v560
    %v562 = vpop.f32.mrb[0].mxu0
    %v563 = vpop.f32.mrb[0].mxu0
    %v564 = vadd.f32 %v324, %v563
    %v565 = vpop.f32.mrb[0].mxu0
    %566 = vmatprep.mubr.bf16.mxu0 %v200
    %567 = vmatmul.mubr.bf16.gmra.mrb[0].mxu0 %v199
    %v568 = vpop.f32.mrb[0].mxu0
    %v569 = vadd.f32 %v324, %v568
    %v570 = vpop.f32.mrb[0].mxu0
    %v571 = vpop.f32.mrb[0].mxu0
    %v572 = vadd.f32 %v324, %v571
    %v573 = vpop.f32.mrb[0].mxu0
    %574 = vmatprep.mubr.bf16.mxu0 %v204
    %575 = vmatmul.mubr.bf16.gmra.mrb[0].mxu0 %v203
    %v576 = vpop.f32.mrb[0].mxu0
    %v577 = vadd.f32 %v324, %v576
    %v578 = vpop.f32.mrb[0].mxu0
    %v579 = vpop.f32.mrb[0].mxu0
    %v580 = vadd.f32 %v324, %v579
    %v581 = vpop.f32.mrb[0].mxu0
    %582 = vmatprep.mubr.bf16.mxu0 %v208
    %583 = vmatmul.mubr.bf16.gmra.mrb[0].mxu0 %v207
    %v584 = vpop.f32.mrb[0].mxu0
    %v585 = vadd.f32 %v324, %v584
    %v586 = vpop.f32.mrb[0].mxu0
    %v587 = vpop.f32.mrb[0].mxu0
    %v588 = vadd.f32 %v324, %v587
    %v589 = vpop.f32.mrb[0].mxu0
    %590 = vmatprep.mubr.bf16.mxu0 %v212
    %591 = vmatmul.mubr.bf16.gmra.mrb[0].mxu0 %v211
    %v592 = vpop.f32.mrb[0].mxu0
    %v593 = vadd.f32 %v324, %v592
    %v594 = vpop.f32.mrb[0].mxu0
    %v595 = vpop.f32.mrb[0].mxu0
    %v596 = vadd.f32 %v324, %v595
    %v597 = vpop.f32.mrb[0].mxu0
    %598 = vmatprep.mubr.bf16.mxu0 %v216
    %599 = vmatmul.mubr.bf16.gmra.mrb[0].mxu0 %v215
    %v600 = vpop.f32.mrb[0].mxu0
    %v601 = vadd.f32 %v324, %v600
    %v602 = vpop.f32.mrb[0].mxu0
    %v603 = vpop.f32.mrb[0].mxu0
    %v604 = vadd.f32 %v324, %v603
    %v605 = vpop.f32.mrb[0].mxu0
    %606 = vmatprep.mubr.bf16.mxu0 %v220
    %607 = vmatmul.mubr.bf16.gmra.mrb[0].mxu0 %v219
    %v608 = vpop.f32.mrb[0].mxu0
    %v609 = vadd.f32 %v324, %v608
    %v610 = vpop.f32.mrb[0].mxu0
    %v611 = vpop.f32.mrb[0].mxu0
    %v612 = vadd.f32 %v324, %v611
    %v613 = vpop.f32.mrb[0].mxu0
    %614 = vmatprep.mubr.bf16.mxu0 %v224
    %615 = vmatmul.mubr.bf16.gmra.mrb[0].mxu0 %v223
    %v616 = vpop.f32.mrb[0].mxu0
    %v617 = vadd.f32 %v324, %v616
    %v618 = vpop.f32.mrb[0].mxu0
    %v619 = vpop.f32.mrb[0].mxu0
    %v620 = vadd.f32 %v324, %v619
    %v621 = vpop.f32.mrb[0].mxu0
    %622 = vmatprep.mubr.bf16.mxu0 %v228
    %623 = vmatmul.mubr.bf16.gmra.mrb[0].mxu0 %v227
    %v624 = vpop.f32.mrb[0].mxu0
    %v625 = vadd.f32 %v324, %v624
    %v626 = vpop.f32.mrb[0].mxu0
    %v627 = vpop.f32.mrb[0].mxu0
    %v628 = vadd.f32 %v324, %v627
    %v629 = vpop.f32.mrb[0].mxu0
    %630 = vmatprep.mubr.bf16.mxu0 %v232
    %631 = vmatmul.mubr.bf16.gmra.mrb[0].mxu0 %v231
    %v632 = vpop.f32.mrb[0].mxu0
    %v633 = vadd.f32 %v324, %v632
    %v634 = vpop.f32.mrb[0].mxu0
    %v635 = vpop.f32.mrb[0].mxu0
    %v636 = vadd.f32 %v324, %v635
    %v637 = vpop.f32.mrb[0].mxu0
    %638 = vmatprep.mubr.bf16.mxu0 %v236
    %639 = vmatmul.mubr.bf16.gmra.mrb[0].mxu0 %v235
    %v640 = vpop.f32.mrb[0].mxu0
    %v641 = vadd.f32 %v324, %v640
    %v642 = vpop.f32.mrb[0].mxu0
    %v643 = vpop.f32.mrb[0].mxu0
    %v644 = vadd.f32 %v324, %v643
    %v645 = vpop.f32.mrb[0].mxu0
    %646 = vmatprep.mubr.bf16.mxu0 %v240
    %647 = vmatmul.mubr.bf16.gmra.mrb[0].mxu0 %v239
    %v648 = vpop.f32.mrb[0].mxu0
    %v649 = vadd.f32 %v324, %v648
    %v650 = vpop.f32.mrb[0].mxu0
    %v651 = vpop.f32.mrb[0].mxu0
    %v652 = vadd.f32 %v324, %v651
    %v653 = vpop.f32.mrb[0].mxu0
    %654 = vmatprep.mubr.bf16.mxu0 %v244
    %655 = vmatmul.mubr.bf16.gmra.mrb[0].mxu0 %v243
    %v656 = vpop.f32.mrb[0].mxu0
    %v657 = vadd.f32 %v324, %v656
    %v658 = vpop.f32.mrb[0].mxu0
    %v659 = vpop.f32.mrb[0].mxu0
    %v660 = vadd.f32 %v324, %v659
    %v661 = vpop.f32.mrb[0].mxu0
    %662 = vmatprep.mubr.bf16.mxu0 %v248
    %663 = vmatmul.mubr.bf16.gmra.mrb[0].mxu0 %v247
    %v664 = vpop.f32.mrb[0].mxu0
    %v665 = vadd.f32 %v324, %v664
    %v666 = vpop.f32.mrb[0].mxu0
    %v667 = vpop.f32.mrb[0].mxu0
    %v668 = vadd.f32 %v324, %v667
    %v669 = vpop.f32.mrb[0].mxu0
    %670 = vmatprep.mubr.bf16.mxu0 %v252
    %671 = vmatmul.mubr.bf16.gmra.mrb[0].mxu0 %v251
    %v672 = vpop.f32.mrb[0].mxu0
    %v673 = vadd.f32 %v324, %v672
    %v674 = vpop.f32.mrb[0].mxu0
    %v675 = vpop.f32.mrb[0].mxu0
    %v676 = vadd.f32 %v324, %v675
    %v677 = vpop.f32.mrb[0].mxu0
    %678 = vdwg.mxu0
    %679 = vmatprep.subr.bf16.mxu0 0
    %680 = vmatpush1.bf16.msra.mxu0 %v470
    %681 = vmatprep.subr.bf16.mxu0 0
    %682 = vmatpush1.bf16.msra.mxu0 %v471
    %683 = vmatprep.subr.bf16.mxu0 0
    %684 = vmatpush1.bf16.msra.mxu0 %v472
    %685 = vmatprep.subr.bf16.mxu0 0
    %686 = vmatpush1.bf16.msra.mxu0 %v473
    %687 = vmatprep.subr.bf16.mxu0 0
    %688 = vmatpush1.bf16.msra.mxu0 %v474
    %689 = vmatprep.subr.bf16.mxu0 0
    %690 = vmatpush1.bf16.msra.mxu0 %v475
    %691 = vmatprep.subr.bf16.mxu0 0
    %692 = vmatpush1.bf16.msra.mxu0 %v476
    %693 = vmatprep.subr.bf16.mxu0 0
    %694 = vmatpush1.bf16.msra.mxu0 %v477
    %695 = vmatprep.subr.bf16.mxu0 0
    %696 = vmatpush1.bf16.msra.mxu0 %v478
    %697 = vmatprep.subr.bf16.mxu0 0
    %698 = vmatpush1.bf16.msra.mxu0 %v479
    %699 = vmatprep.subr.bf16.mxu0 0
    %700 = vmatpush1.bf16.msra.mxu0 %v480
    %701 = vmatprep.subr.bf16.mxu0 0
    %702 = vmatpush1.bf16.msra.mxu0 %v481
    %703 = vmatprep.subr.bf16.mxu0 0
    %704 = vmatpush1.bf16.msra.mxu0 %v482
    %705 = vmatprep.subr.bf16.mxu0 0
    %706 = vmatpush1.bf16.msra.mxu0 %v483
    %707 = vmatprep.subr.bf16.mxu0 0
    %708 = vmatpush1.bf16.msra.mxu0 %v484
    %709 = vmatprep.subr.bf16.mxu0 0
    %710 = vmatpush1.bf16.msra.mxu0 %v485
    %711 = vmatprep.mubr.bf16.mxu0 %v194
    %712 = vmatmul.mubr.bf16.gmra.mrb[0].mxu0 %v193
    %v713 = vpop.f32.mrb[0].mxu0
    %v714 = vadd.f32 %v553, %v713
    %v715 = vpop.f32.mrb[0].mxu0
    %v716 = vpop.f32.mrb[0].mxu0
    %v717 = vadd.f32 %v556, %v716
    %v718 = vpop.f32.mrb[0].mxu0
    %719 = vmatprep.mubr.bf16.mxu0 %v198
    %720 = vmatmul.mubr.bf16.gmra.mrb[0].mxu0 %v197
    %v721 = vpop.f32.mrb[0].mxu0
    %v722 = vadd.f32 %v561, %v721
    %v723 = vpop.f32.mrb[0].mxu0
    %v724 = vpop.f32.mrb[0].mxu0
    %v725 = vadd.f32 %v564, %v724
    %v726 = vpop.f32.mrb[0].mxu0
    %727 = vmatprep.mubr.bf16.mxu0 %v202
    %728 = vmatmul.mubr.bf16.gmra.mrb[0].mxu0 %v201
    %v729 = vpop.f32.mrb[0].mxu0
    %v730 = vadd.f32 %v569, %v729
    %v731 = vpop.f32.mrb[0].mxu0
    %v732 = vpop.f32.mrb[0].mxu0
    %v733 = vadd.f32 %v572, %v732
    %v734 = vpop.f32.mrb[0].mxu0
    %735 = vmatprep.mubr.bf16.mxu0 %v206
    %736 = vmatmul.mubr.bf16.gmra.mrb[0].mxu0 %v205
    %v737 = vpop.f32.mrb[0].mxu0
    %v738 = vadd.f32 %v577, %v737
    %v739 = vpop.f32.mrb[0].mxu0
    %v740 = vpop.f32.mrb[0].mxu0
    %v741 = vadd.f32 %v580, %v740
    %v742 = vpop.f32.mrb[0].mxu0
    %743 = vmatprep.mubr.bf16.mxu0 %v210
    %744 = vmatmul.mubr.bf16.gmra.mrb[0].mxu0 %v209
    %v745 = vpop.f32.mrb[0].mxu0
    %v746 = vadd.f32 %v585, %v745
    %v747 = vpop.f32.mrb[0].mxu0
    %v748 = vpop.f32.mrb[0].mxu0
    %v749 = vadd.f32 %v588, %v748
    %v750 = vpop.f32.mrb[0].mxu0
    %751 = vmatprep.mubr.bf16.mxu0 %v214
    %752 = vmatmul.mubr.bf16.gmra.mrb[0].mxu0 %v213
    %v753 = vpop.f32.mrb[0].mxu0
    %v754 = vadd.f32 %v593, %v753
    %v755 = vpop.f32.mrb[0].mxu0
    %v756 = vpop.f32.mrb[0].mxu0
    %v757 = vadd.f32 %v596, %v756
    %v758 = vpop.f32.mrb[0].mxu0
    %759 = vmatprep.mubr.bf16.mxu0 %v218
    %760 = vmatmul.mubr.bf16.gmra.mrb[0].mxu0 %v217
    %v761 = vpop.f32.mrb[0].mxu0
    %v762 = vadd.f32 %v601, %v761
    %v763 = vpop.f32.mrb[0].mxu0
    %v764 = vpop.f32.mrb[0].mxu0
    %v765 = vadd.f32 %v604, %v764
    %v766 = vpop.f32.mrb[0].mxu0
    %767 = vmatprep.mubr.bf16.mxu0 %v222
    %768 = vmatmul.mubr.bf16.gmra.mrb[0].mxu0 %v221
    %v769 = vpop.f32.mrb[0].mxu0
    %v770 = vadd.f32 %v609, %v769
    %v771 = vpop.f32.mrb[0].mxu0
    %v772 = vpop.f32.mrb[0].mxu0
    %v773 = vadd.f32 %v612, %v772
    %v774 = vpop.f32.mrb[0].mxu0
    %775 = vmatprep.mubr.bf16.mxu0 %v226
    %776 = vmatmul.mubr.bf16.gmra.mrb[0].mxu0 %v225
    %v777 = vpop.f32.mrb[0].mxu0
    %v778 = vadd.f32 %v617, %v777
    %v779 = vpop.f32.mrb[0].mxu0
    %v780 = vpop.f32.mrb[0].mxu0
    %v781 = vadd.f32 %v620, %v780
    %v782 = vpop.f32.mrb[0].mxu0
    %783 = vmatprep.mubr.bf16.mxu0 %v230
    %784 = vmatmul.mubr.bf16.gmra.mrb[0].mxu0 %v229
    %v785 = vpop.f32.mrb[0].mxu0
    %v786 = vadd.f32 %v625, %v785
    %v787 = vpop.f32.mrb[0].mxu0
    %v788 = vpop.f32.mrb[0].mxu0
    %v789 = vadd.f32 %v628, %v788
    %v790 = vpop.f32.mrb[0].mxu0
    %791 = vmatprep.mubr.bf16.mxu0 %v234
    %792 = vmatmul.mubr.bf16.gmra.mrb[0].mxu0 %v233
    %v793 = vpop.f32.mrb[0].mxu0
    %v794 = vadd.f32 %v633, %v793
    %v795 = vpop.f32.mrb[0].mxu0
    %v796 = vpop.f32.mrb[0].mxu0
    %v797 = vadd.f32 %v636, %v796
    %v798 = vpop.f32.mrb[0].mxu0
    %799 = vmatprep.mubr.bf16.mxu0 %v238
    %800 = vmatmul.mubr.bf16.gmra.mrb[0].mxu0 %v237
    %v801 = vpop.f32.mrb[0].mxu0
    %v802 = vadd.f32 %v641, %v801
    %v803 = vpop.f32.mrb[0].mxu0
    %v804 = vpop.f32.mrb[0].mxu0
    %v805 = vadd.f32 %v644, %v804
    %v806 = vpop.f32.mrb[0].mxu0
    %807 = vmatprep.mubr.bf16.mxu0 %v242
    %808 = vmatmul.mubr.bf16.gmra.mrb[0].mxu0 %v241
    %v809 = vpop.f32.mrb[0].mxu0
    %v810 = vadd.f32 %v649, %v809
    %v811 = vpop.f32.mrb[0].mxu0
    %v812 = vpop.f32.mrb[0].mxu0
    %v813 = vadd.f32 %v652, %v812
    %v814 = vpop.f32.mrb[0].mxu0
    %815 = vmatprep.mubr.bf16.mxu0 %v246
    %816 = vmatmul.mubr.bf16.gmra.mrb[0].mxu0 %v245
    %v817 = vpop.f32.mrb[0].mxu0
    %v818 = vadd.f32 %v657, %v817
    %v819 = vpop.f32.mrb[0].mxu0
    %v820 = vpop.f32.mrb[0].mxu0
    %v821 = vadd.f32 %v660, %v820
    %v822 = vpop.f32.mrb[0].mxu0
    %823 = vmatprep.mubr.bf16.mxu0 %v250
    %824 = vmatmul.mubr.bf16.gmra.mrb[0].mxu0 %v249
    %v825 = vpop.f32.mrb[0].mxu0
    %v826 = vadd.f32 %v665, %v825
    %v827 = vpop.f32.mrb[0].mxu0
    %v828 = vpop.f32.mrb[0].mxu0
    %v829 = vadd.f32 %v668, %v828
    %v830 = vpop.f32.mrb[0].mxu0
    %831 = vmatprep.mubr.bf16.mxu0 %v254
    %832 = vmatmul.mubr.bf16.gmra.mrb[0].mxu0 %v253
    %v833 = vpop.f32.mrb[0].mxu0
    %v834 = vadd.f32 %v673, %v833
    %v835 = vpop.f32.mrb[0].mxu0
    %v836 = vpop.f32.mrb[0].mxu0
    %v837 = vadd.f32 %v676, %v836
    %v838 = vpop.f32.mrb[0].mxu0
    %839 = vdwg.mxu0
    %v840 = vmax.f32 %v714, 0.0
    %v841 = vmax.f32 %v717, 0.0
    %v842 = vmax.f32 %v722, 0.0
    %v843 = vmax.f32 %v725, 0.0
    %v844 = vmax.f32 %v730, 0.0
    %v845 = vmax.f32 %v733, 0.0
    %v846 = vmax.f32 %v738, 0.0
    %v847 = vmax.f32 %v741, 0.0
    %v848 = vmax.f32 %v746, 0.0
    %v849 = vmax.f32 %v749, 0.0
    %v850 = vmax.f32 %v754, 0.0
    %v851 = vmax.f32 %v757, 0.0
    %v852 = vmax.f32 %v762, 0.0
    %v853 = vmax.f32 %v765, 0.0
    %v854 = vmax.f32 %v770, 0.0
    %v855 = vmax.f32 %v773, 0.0
    %v856 = vmax.f32 %v778, 0.0
    %v857 = vmax.f32 %v781, 0.0
    %v858 = vmax.f32 %v786, 0.0
    %v859 = vmax.f32 %v789, 0.0
    %v860 = vmax.f32 %v794, 0.0
    %v861 = vmax.f32 %v797, 0.0
    %v862 = vmax.f32 %v802, 0.0
    %v863 = vmax.f32 %v805, 0.0
    %v864 = vmax.f32 %v810, 0.0
    %v865 = vmax.f32 %v813, 0.0
    %v866 = vmax.f32 %v818, 0.0
    %v867 = vmax.f32 %v821, 0.0
    %v868 = vmax.f32 %v826, 0.0
    %v869 = vmax.f32 %v829, 0.0
    %v870 = vmax.f32 %v834, 0.0
    %v871 = vmax.f32 %v837, 0.0
    %v872 = vpack.c.bf16 %v841, %v840
    %v873 = vpack.c.bf16 %v843, %v842
    %v874 = vpack.c.bf16 %v845, %v844
    %v875 = vpack.c.bf16 %v847, %v846
    %v876 = vpack.c.bf16 %v849, %v848
    %v877 = vpack.c.bf16 %v851, %v850
    %v878 = vpack.c.bf16 %v853, %v852
    %v879 = vpack.c.bf16 %v855, %v854
    %v880 = vpack.c.bf16 %v857, %v856
    %v881 = vpack.c.bf16 %v859, %v858
    %v882 = vpack.c.bf16 %v861, %v860
    %v883 = vpack.c.bf16 %v863, %v862
    %v884 = vpack.c.bf16 %v865, %v864
    %v885 = vpack.c.bf16 %v867, %v866
    %v886 = vpack.c.bf16 %v869, %v868
    %v887 = vpack.c.bf16 %v871, %v870
    %v888 = vld [vmem:[#allocation7] sm:$0xf]
    %v889 = vld [vmem:[#allocation7 + $0x4] sm:$0xf]
    %v890 = vld [vmem:[#allocation7 + $0x8] sm:$0xf]
    %v891 = vld [vmem:[#allocation7 + $0xc] sm:$0xf]
    %v892 = vld [vmem:[#allocation7 + $0x10] sm:$0xf]
    %v893 = vld [vmem:[#allocation7 + $0x14] sm:$0xf]
    %v894 = vld [vmem:[#allocation7 + $0x18] sm:$0xf]
    %v895 = vld [vmem:[#allocation7 + $0x1c] sm:$0xf]
    %v896 = vld [vmem:[#allocation7 + $0x20] sm:$0xf]
    %v897 = vld [vmem:[#allocation7 + $0x24] sm:$0xf]
    %v898 = vld [vmem:[#allocation7 + $0x28] sm:$0xf]
    %v899 = vld [vmem:[#allocation7 + $0x2c] sm:$0xf]
    %v900 = vld [vmem:[#allocation7 + $0x30] sm:$0xf]
    %v901 = vld [vmem:[#allocation7 + $0x34] sm:$0xf]
    %v902 = vld [vmem:[#allocation7 + $0x38] sm:$0xf]
    %v903 = vld [vmem:[#allocation7 + $0x3c] sm:$0xf]
    %v904 = vld [vmem:[%s4] sm:$0x1]
    %v906 = vlaneseq
    %v907 = vshrl.u32 %v906, 7
    %v908 = vsub.s32 0, %v907
    %v909 = vrot.slane %v904, %v908
    %v927 = vunpack.c.l.b16 %v888
    %v928 = vunpack.c.l.b16 %v889
    %v929 = vunpack.c.l.b16 %v890
    %v930 = vunpack.c.l.b16 %v891
    %v931 = vunpack.c.l.b16 %v892
    %v932 = vunpack.c.l.b16 %v893
    %v933 = vunpack.c.l.b16 %v894
    %v934 = vunpack.c.l.b16 %v895
    %v935 = vunpack.c.l.b16 %v896
    %v936 = vunpack.c.l.b16 %v897
    %v937 = vunpack.c.l.b16 %v898
    %v938 = vunpack.c.l.b16 %v899
    %v939 = vunpack.c.l.b16 %v900
    %v940 = vunpack.c.l.b16 %v901
    %v941 = vunpack.c.l.b16 %v902
    %v942 = vunpack.c.l.b16 %v903
    %v943 = vpack.c.b16 %v928, %v927
    %v944 = vpack.c.b16 %v930, %v929
    %v945 = vpack.c.b16 %v932, %v931
    %v946 = vpack.c.b16 %v934, %v933
    %v947 = vpack.c.b16 %v936, %v935
    %v948 = vpack.c.b16 %v938, %v937
    %v949 = vpack.c.b16 %v940, %v939
    %v950 = vpack.c.b16 %v942, %v941
    %959 = vmatprep.subr.bf16.mxu0 0
    %960 = vmatpush1.bf16.msra.mxu0 %v943
    %961 = vmatprep.subr.bf16.mxu0 0
    %962 = vmatpush1.bf16.msra.mxu0 %v944
    %963 = vmatprep.subr.bf16.mxu0 0
    %964 = vmatpush1.bf16.msra.mxu0 %v945
    %965 = vmatprep.subr.bf16.mxu0 0
    %966 = vmatpush1.bf16.msra.mxu0 %v946
    %967 = vmatprep.subr.bf16.mxu0 0
    %968 = vmatpush1.bf16.msra.mxu0 %v947
    %969 = vmatprep.subr.bf16.mxu0 0
    %970 = vmatpush1.bf16.msra.mxu0 %v948
    %971 = vmatprep.subr.bf16.mxu0 0
    %972 = vmatpush1.bf16.msra.mxu0 %v949
    %973 = vmatprep.subr.bf16.mxu0 0
    %974 = vmatpush1.bf16.msra.mxu0 %v950
    %975 = vmatprep.subr.bf16.mxu0 0
    %976 = vmatpush1.bf16.msra.mxu0 0
    %977 = vmatprep.subr.bf16.mxu0 0
    %978 = vmatpush1.bf16.msra.mxu0 0
    %979 = vmatprep.subr.bf16.mxu0 0
    %980 = vmatpush1.bf16.msra.mxu0 0
    %981 = vmatprep.subr.bf16.mxu0 0
    %982 = vmatpush1.bf16.msra.mxu0 0
    %983 = vmatprep.subr.bf16.mxu0 0
    %984 = vmatpush1.bf16.msra.mxu0 0
    %985 = vmatprep.subr.bf16.mxu0 0
    %986 = vmatpush1.bf16.msra.mxu0 0
    %987 = vmatprep.subr.bf16.mxu0 0
    %988 = vmatpush1.bf16.msra.mxu0 0
    %989 = vmatprep.subr.bf16.mxu0 0
    %990 = vmatpush1.bf16.msra.mxu0 0
    %991 = vmatprep.mubr.bf16.mxu0 0
    %992 = vmatmul.mubr.bf16.gmra.mrb[0].mxu0 %v872
    %v993 = vpop.f32.mrb[0].mxu0
    %v994 = vadd.f32 %v909, %v993
    %v995 = vpop.f32.mrb[0].mxu0
    %v996 = vpop.f32.mrb[0].mxu0
    %v997 = vadd.f32 %v909, %v996
    %v998 = vpop.f32.mrb[0].mxu0
    %999 = vmatprep.mubr.bf16.mxu0 0
    %1000 = vmatmul.mubr.bf16.gmra.mrb[0].mxu0 %v873
    %v1001 = vpop.f32.mrb[0].mxu0
    %v1002 = vadd.f32 %v909, %v1001
    %v1003 = vpop.f32.mrb[0].mxu0
    %v1004 = vpop.f32.mrb[0].mxu0
    %v1005 = vadd.f32 %v909, %v1004
    %v1006 = vpop.f32.mrb[0].mxu0
    %1007 = vmatprep.mubr.bf16.mxu0 0
    %1008 = vmatmul.mubr.bf16.gmra.mrb[0].mxu0 %v874
    %v1009 = vpop.f32.mrb[0].mxu0
    %v1010 = vadd.f32 %v909, %v1009
    %v1011 = vpop.f32.mrb[0].mxu0
    %v1012 = vpop.f32.mrb[0].mxu0
    %v1013 = vadd.f32 %v909, %v1012
    %v1014 = vpop.f32.mrb[0].mxu0
    %1015 = vmatprep.mubr.bf16.mxu0 0
    %1016 = vmatmul.mubr.bf16.gmra.mrb[0].mxu0 %v875
    %v1017 = vpop.f32.mrb[0].mxu0
    %v1018 = vadd.f32 %v909, %v1017
    %v1019 = vpop.f32.mrb[0].mxu0
    %v1020 = vpop.f32.mrb[0].mxu0
    %v1021 = vadd.f32 %v909, %v1020
    %v1022 = vpop.f32.mrb[0].mxu0
    %1023 = vmatprep.mubr.bf16.mxu0 0
    %1024 = vmatmul.mubr.bf16.gmra.mrb[0].mxu0 %v876
    %v1025 = vpop.f32.mrb[0].mxu0
    %v1026 = vadd.f32 %v909, %v1025
    %v1027 = vpop.f32.mrb[0].mxu0
    %v1028 = vpop.f32.mrb[0].mxu0
    %v1029 = vadd.f32 %v909, %v1028
    %v1030 = vpop.f32.mrb[0].mxu0
    %1031 = vmatprep.mubr.bf16.mxu0 0
    %1032 = vmatmul.mubr.bf16.gmra.mrb[0].mxu0 %v877
    %v1033 = vpop.f32.mrb[0].mxu0
    %v1034 = vadd.f32 %v909, %v1033
    %v1035 = vpop.f32.mrb[0].mxu0
    %v1036 = vpop.f32.mrb[0].mxu0
    %v1037 = vadd.f32 %v909, %v1036
    %v1038 = vpop.f32.mrb[0].mxu0
    %1039 = vmatprep.mubr.bf16.mxu0 0
    %1040 = vmatmul.mubr.bf16.gmra.mrb[0].mxu0 %v878
    %v1041 = vpop.f32.mrb[0].mxu0
    %v1042 = vadd.f32 %v909, %v1041
    %v1043 = vpop.f32.mrb[0].mxu0
    %v1044 = vpop.f32.mrb[0].mxu0
    %v1045 = vadd.f32 %v909, %v1044
    %v1046 = vpop.f32.mrb[0].mxu0
    %1047 = vmatprep.mubr.bf16.mxu0 0
    %1048 = vmatmul.mubr.bf16.gmra.mrb[0].mxu0 %v879
    %v1049 = vpop.f32.mrb[0].mxu0
    %v1050 = vadd.f32 %v909, %v1049
    %v1051 = vpop.f32.mrb[0].mxu0
    %v1052 = vpop.f32.mrb[0].mxu0
    %v1053 = vadd.f32 %v909, %v1052
    %v1054 = vpop.f32.mrb[0].mxu0
    %1055 = vmatprep.mubr.bf16.mxu0 0
    %1056 = vmatmul.mubr.bf16.gmra.mrb[0].mxu0 %v880
    %v1057 = vpop.f32.mrb[0].mxu0
    %v1058 = vadd.f32 %v909, %v1057
    %v1059 = vpop.f32.mrb[0].mxu0
    %v1060 = vpop.f32.mrb[0].mxu0
    %v1061 = vadd.f32 %v909, %v1060
    %v1062 = vpop.f32.mrb[0].mxu0
    %1063 = vmatprep.mubr.bf16.mxu0 0
    %1064 = vmatmul.mubr.bf16.gmra.mrb[0].mxu0 %v881
    %v1065 = vpop.f32.mrb[0].mxu0
    %v1066 = vadd.f32 %v909, %v1065
    %v1067 = vpop.f32.mrb[0].mxu0
    %v1068 = vpop.f32.mrb[0].mxu0
    %v1069 = vadd.f32 %v909, %v1068
    %v1070 = vpop.f32.mrb[0].mxu0
    %1071 = vmatprep.mubr.bf16.mxu0 0
    %1072 = vmatmul.mubr.bf16.gmra.mrb[0].mxu0 %v882
    %v1073 = vpop.f32.mrb[0].mxu0
    %v1074 = vadd.f32 %v909, %v1073
    %v1075 = vpop.f32.mrb[0].mxu0
    %v1076 = vpop.f32.mrb[0].mxu0
    %v1077 = vadd.f32 %v909, %v1076
    %v1078 = vpop.f32.mrb[0].mxu0
    %1079 = vmatprep.mubr.bf16.mxu0 0
    %1080 = vmatmul.mubr.bf16.gmra.mrb[0].mxu0 %v883
    %v1081 = vpop.f32.mrb[0].mxu0
    %v1082 = vadd.f32 %v909, %v1081
    %v1083 = vpop.f32.mrb[0].mxu0
    %v1084 = vpop.f32.mrb[0].mxu0
    %v1085 = vadd.f32 %v909, %v1084
    %v1086 = vpop.f32.mrb[0].mxu0
    %1087 = vmatprep.mubr.bf16.mxu0 0
    %1088 = vmatmul.mubr.bf16.gmra.mrb[0].mxu0 %v884
    %v1089 = vpop.f32.mrb[0].mxu0
    %v1090 = vadd.f32 %v909, %v1089
    %v1091 = vpop.f32.mrb[0].mxu0
    %v1092 = vpop.f32.mrb[0].mxu0
    %v1093 = vadd.f32 %v909, %v1092
    %v1094 = vpop.f32.mrb[0].mxu0
    %1095 = vmatprep.mubr.bf16.mxu0 0
    %1096 = vmatmul.mubr.bf16.gmra.mrb[0].mxu0 %v885
    %v1097 = vpop.f32.mrb[0].mxu0
    %v1098 = vadd.f32 %v909, %v1097
    %v1099 = vpop.f32.mrb[0].mxu0
    %v1100 = vpop.f32.mrb[0].mxu0
    %v1101 = vadd.f32 %v909, %v1100
    %v1102 = vpop.f32.mrb[0].mxu0
    %1103 = vmatprep.mubr.bf16.mxu0 0
    %1104 = vmatmul.mubr.bf16.gmra.mrb[0].mxu0 %v886
    %v1105 = vpop.f32.mrb[0].mxu0
    %v1106 = vadd.f32 %v909, %v1105
    %v1107 = vpop.f32.mrb[0].mxu0
    %v1108 = vpop.f32.mrb[0].mxu0
    %v1109 = vadd.f32 %v909, %v1108
    %v1110 = vpop.f32.mrb[0].mxu0
    %1111 = vmatprep.mubr.bf16.mxu0 0
    %1112 = vmatmul.mubr.bf16.gmra.mrb[0].mxu0 %v887
    %v1113 = vpop.f32.mrb[0].mxu0
    %v1114 = vadd.f32 %v909, %v1113
    %v1115 = vpop.f32.mrb[0].mxu0
    %v1116 = vpop.f32.mrb[0].mxu0
    %v1117 = vadd.f32 %v909, %v1116
    %v1118 = vpop.f32.mrb[0].mxu0
    %1119 = vdwg.mxu0
    %1120 = vst [vmem:[#allocation8] sm:$0xff] %v994
    %1121 = vst [vmem:[#allocation8 + $0x8] sm:$0xff] %v997
    %1122 = vst [vmem:[#allocation8 + $0x10] sm:$0xff] %v1002
    %1123 = vst [vmem:[#allocation8 + $0x18] sm:$0xff] %v1005
    %1124 = vst [vmem:[#allocation8 + $0x20] sm:$0xff] %v1010
    %1125 = vst [vmem:[#allocation8 + $0x28] sm:$0xff] %v1013
    %1126 = vst [vmem:[#allocation8 + $0x30] sm:$0xff] %v1018
    %1127 = vst [vmem:[#allocation8 + $0x38] sm:$0xff] %v1021
    %1128 = vst [vmem:[#allocation8 + $0x40] sm:$0xff] %v1026
    %1129 = vst [vmem:[#allocation8 + $0x48] sm:$0xff] %v1029
    %1130 = vst [vmem:[#allocation8 + $0x50] sm:$0xff] %v1034
    %1131 = vst [vmem:[#allocation8 + $0x58] sm:$0xff] %v1037
    %1132 = vst [vmem:[#allocation8 + $0x60] sm:$0xff] %v1042
    %1133 = vst [vmem:[#allocation8 + $0x68] sm:$0xff] %v1045
    %1134 = vst [vmem:[#allocation8 + $0x70] sm:$0xff] %v1050
    %1135 = vst [vmem:[#allocation8 + $0x78] sm:$0xff] %v1053
    %1136 = vst [vmem:[#allocation8 + $0x80] sm:$0xff] %v1058
    %1137 = vst [vmem:[#allocation8 + $0x88] sm:$0xff] %v1061
    %1138 = vst [vmem:[#allocation8 + $0x90] sm:$0xff] %v1066
    %1139 = vst [vmem:[#allocation8 + $0x98] sm:$0xff] %v1069
    %1140 = vst [vmem:[#allocation8 + $0xa0] sm:$0xff] %v1074
    %1141 = vst [vmem:[#allocation8 + $0xa8] sm:$0xff] %v1077
    %1142 = vst [vmem:[#allocation8 + $0xb0] sm:$0xff] %v1082
    %1143 = vst [vmem:[#allocation8 + $0xb8] sm:$0xff] %v1085
    %1144 = vst [vmem:[#allocation8 + $0xc0] sm:$0xff] %v1090
    %1145 = vst [vmem:[#allocation8 + $0xc8] sm:$0xff] %v1093
    %1146 = vst [vmem:[#allocation8 + $0xd0] sm:$0xff] %v1098
    %1147 = vst [vmem:[#allocation8 + $0xd8] sm:$0xff] %v1101
    %1148 = vst [vmem:[#allocation8 + $0xe0] sm:$0xff] %v1106
    %1149 = vst [vmem:[#allocation8 + $0xe8] sm:$0xff] %v1109
    %1150 = vst [vmem:[#allocation8 + $0xf0] sm:$0xff] %v1114
    %1151 = vst [vmem:[#allocation8 + $0xf8] sm:$0xff] %v1117
    // Predicated region
    $region34: #{projection_head.1} parent=1 // pred_check
      _
    $region35: #{projection_head.1} parent=1 // pred_check_branch
      %1153 = sbr.rel (0) target = $region37
    $region36: #{projection_head.1} parent=1 // pred_region
      %s1155 = ssub.s32 4096, 4096
      %1156 = vsyncadd [#allocation4], %s1155
      %s1157 = sshll.u32 [#allocation8], 4
      %s1158 = int_to_ptr.vmem [resolvable:$true] %s1157
      %1163 = dma.vmem_to_hbm [thread:$0]  %s1158, 4096, %s5, [#allocation4], 128, 128, 8
    $region37: #{projection_head.1} parent=1 // pred_fallthru
      _
    // Predicated region
    $region38: #{projection_head.1} parent=1 // pred_check
      _
    $region39: #{projection_head.1} parent=1 // pred_check_branch
      %1165 = sbr.rel (0) target = $region41
    $region40: #{projection_head.1} parent=1 // pred_region
      %1166 = dma.done [#allocation4], 4096
    $region41: #{projection_head.1} parent=1 // pred_fallthru
      _
    %1167 = vsyncpa [#allocation3], 1
    %1168 = vsyncpa [#allocation6], 1
    %1169 = vsyncpa [#allocation4], 1

</llo_original>
